<compile_context>
chip_gen: v7x
topology: tpu7x:2x2x1
jax: 0.10.0
libtpu: 0.0.40
codegen_flags: <defaults>
</compile_context>

<pallas_src>
import functools

import jax
import jax.numpy as jnp
from jax.experimental import pallas as pl
from jax.experimental.pallas import tpu as pltpu


def _combine_matrix(ck):
    """(ck, ck) bf16 constant for the column (W-parity) butterfly.

    For an LHS row holding one ck-wide chunk of the H-parity sum (or diff):
      out cols [0 : ck/2)  = 0.5 * (even src col + odd src col)   -> LL (or LH)
      out cols [ck/2 : ck) = 0.5 * (odd  src col - even src col)  -> HL (or HH)
    Entries are {0, +-0.5}: exactly representable in bf16.
    """
    hc = ck // 2
    i_idx = jax.lax.broadcasted_iota(jnp.int32, (ck, ck), 0)  # source column
    j_idx = jax.lax.broadcasted_iota(jnp.int32, (ck, ck), 1)  # output column
    jm = jnp.where(j_idx < hc, j_idx, j_idx - hc)             # output pair index
    hit_e = i_idx == 2 * jm                                   # even source column
    hit_o = i_idx == 2 * jm + 1                               # odd  source column
    is_sum = j_idx < hc
    q = jnp.where(hit_o, 0.5, 0.0) + jnp.where(
        hit_e, jnp.where(is_sum, 0.5, -0.5), 0.0)
    return q.astype(jnp.bfloat16)


def _split3_bf16(x):
    """Exact 3-way bf16 split: sum(parts) == x to f32 precision (24 mantissa bits)."""
    xf = x.astype(jnp.float32)
    p0 = xf.astype(jnp.bfloat16)
    r1 = xf - p0.astype(jnp.float32)
    p1 = r1.astype(jnp.bfloat16)
    r2 = r1 - p1.astype(jnp.float32)
    p2 = r2.astype(jnp.bfloat16)
    return (p0, p1, p2)


def _dwt_kernel(q_ref, x_ref, o_ref, *, W, tc, th, ck, split_lhs):
    # q_ref: (ck, ck) bf16 combine matrix (constant block index -> fetched once).
    # x_ref: (1, tc, th, 2W); last dim is the fused row [even H row | odd H row].
    # o_ref: (1, 4, tc, th, W//2); subband groups [LL, HL, LH, HH] on dim 1.
    k = W // ck
    hc = ck // 2
    R = tc * th

    xe = x_ref[0, :, :, :W]          # even H rows, (tc, th, W), input dtype
    xo = x_ref[0, :, :, W:]          # odd  H rows

    # H-parity butterfly on the VPU (no unconditional f32 upcast: bf16 stays bf16).
    s = xe + xo                      # -> LL / HL after the column butterfly
    d = xo - xe                      # -> LH / HH

    # Collapse (tc, th) -> rows.  Free relayout: th % 8 == 0 (or tc == 1).
    s2 = s.reshape(R, W)
    d2 = d.reshape(R, W)

    q = q_ref[...]
    out_dtype = o_ref.dtype

    def col_butterfly(t):
        # t: (R, ck) chunk of the H-parity sum/diff.
        if split_lhs:
            parts = _split3_bf16(t)      # 3 exact bf16 terms -> 3 bf16 MXU passes
        else:
            parts = (t,)                 # bf16 input: single native bf16 pass
        acc = None
        for p in parts:
            y = jnp.dot(p, q, preferred_element_type=jnp.float32)
            acc = y if acc is None else acc + y
        return acc.reshape(tc, th, ck).astype(out_dtype)

    # Per-W-chunk column butterfly on the MXU; each result is stored directly into
    # the output lane slices (no concatenates, no block-sized VMEM round trips).
    for i in range(k):
        lo, hi = i * ck, (i + 1) * ck
        ys = col_butterfly(s2[:, lo:hi])     # (tc, th, ck) = [LL_i | HL_i]
        yd = col_butterfly(d2[:, lo:hi])     # (tc, th, ck) = [LH_i | HH_i]
        osl = slice(i * hc, (i + 1) * hc)
        o_ref[0, 0, :, :, osl] = ys[..., :hc]
        o_ref[0, 1, :, :, osl] = ys[..., hc:]
        o_ref[0, 2, :, :, osl] = yd[..., :hc]
        o_ref[0, 3, :, :, osl] = yd[..., hc:]


def _vmem_budget():
    """(block_cap_bytes, vmem_limit_bytes), sized to the running chip's VMEM."""
    vmem = 64 * 1024 * 1024
    try:
        vmem = int(getattr(pltpu.get_tpu_info(), "vmem_capacity_bytes", vmem))
    except Exception:
        pass
    if vmem >= 128 * 1024 * 1024:                 # v5e / v6e class (128 MiB VMEM)
        return 4 * 1024 * 1024, 64 * 1024 * 1024
    return 2 * 1024 * 1024, 40 * 1024 * 1024      # v7x class (64 MiB VMEM)


def _pick_ck(W):
    """Chunk width for the in-kernel matmul (bounds MXU K at <= 128)."""
    if W <= 128:
        return W
    for c in (128, 64, 32, 16, 8, 4, 2):
        if W % c == 0:
            return c
    return W


def _pick_tiles(C, Hh, W, itemsize, cap_bytes):
    """Pick (tc, th); grow the row-pair tile first, then channels, up to cap_bytes.

    For realistic MWCNN feature maps the cap still leaves dozens of grid steps,
    so both v7x TensorCores stay busy under all-"parallel" dimension semantics.
    """
    row_bytes = 2 * W * itemsize
    if Hh % 8 != 0:
        # Keep the in-kernel (tc, th) collapse a free relayout.
        return 1, Hh
    th = 8
    for t in (256, 128, 64, 32, 16, 8):
        if Hh % t == 0 and t * row_bytes <= cap_bytes:
            th = t
            break
    tc = 1
    for c in (32, 16, 8, 4, 2):
        if C % c == 0 and c * th * row_bytes <= cap_bytes:
            tc = c
            break
    return tc, th


@jax.jit
def dwt(x):
    """Pallas DWT. x: (B, C, H, W), H and W even. Returns (B, 4C, H/2, W/2)."""
    B, C, H, W = x.shape
    assert H % 2 == 0 and W % 2 == 0, "DWT needs even spatial dims"
    Hh, Wh = H // 2, W // 2

    cap_bytes, vmem_limit = _vmem_budget()
    tc, th = _pick_tiles(C, Hh, W, x.dtype.itemsize, cap_bytes)
    ck = _pick_ck(W)
    split_lhs = x.dtype != jnp.bfloat16   # f32 path: exact 3x bf16 LHS split

    q = _combine_matrix(ck)

    # Free, contiguous reshape: each fused row = [even H row | odd H row].
    xr = x.reshape(B, C, Hh, 2 * W)

    grid = (B, C // tc, Hh // th)
    kernel = functools.partial(
        _dwt_kernel, W=W, tc=tc, th=th, ck=ck, split_lhs=split_lhs)

    out5 = pl.pallas_call(
        kernel,
        out_shape=jax.ShapeDtypeStruct((B, 4, C, Hh, Wh), x.dtype),
        grid=grid,
        in_specs=[
            pl.BlockSpec((ck, ck), lambda b, c, h: (0, 0)),          # q: fetched once
            pl.BlockSpec((1, tc, th, 2 * W), lambda b, c, h: (b, c, h, 0)),
        ],
        out_specs=pl.BlockSpec((1, 4, tc, th, Wh), lambda b, c, h: (b, 0, c, h, 0)),
        compiler_params=pltpu.CompilerParams(
            dimension_semantics=("parallel", "parallel", "parallel"),
            vmem_limit_bytes=vmem_limit,
        ),
    )(q, xr)

    # Free reshape: (B, 4, C, Hh, Wh) -> (B, 4C, Hh, Wh), channel order LL,HL,LH,HH.
    return out5.reshape(B, 4 * C, Hh, Wh)


def dwt_reference(x):
    """Pure-JAX reference mirroring the PyTorch module."""
    x01 = x[:, :, 0::2] / 2
    x02 = x[:, :, 1::2] / 2
    x1 = x01[..., 0::2]
    x2 = x02[..., 0::2]
    x3 = x01[..., 1::2]
    x4 = x02[..., 1::2]
    x_ll = x1 + x2 + x3 + x4
    x_hl = -x1 - x2 + x3 + x4
    x_lh = -x1 + x2 - x3 + x4
    x_hh = x1 - x2 - x3 + x4
    return jnp.concatenate([x_ll, x_hl, x_lh, x_hh], axis=1)


if __name__ == "__main__":
    # Small shape from the spec.
    B, C, H, W = 2, 4, 16, 16
    x = jax.random.normal(jax.random.PRNGKey(0), (B, C, H, W), dtype=jnp.float32)
    out = jax.block_until_ready(dwt(x))
    ref = dwt_reference(x)
    assert out.shape == (B, 4 * C, H // 2, W // 2), out.shape
    assert out.dtype == x.dtype
    err = float(jnp.max(jnp.abs(out - ref)))
    assert jnp.allclose(out, ref, atol=1e-5, rtol=1e-5), err

    # Larger shape exercising the multi-chunk (k > 1) path and bigger row/channel tiles.
    B2, C2, H2, W2 = 1, 8, 64, 256
    x2 = jax.random.normal(jax.random.PRNGKey(1), (B2, C2, H2, W2), dtype=jnp.float32)
    out2 = jax.block_until_ready(dwt(x2))
    ref2 = dwt_reference(x2)
    err2 = float(jnp.max(jnp.abs(out2 - ref2)))
    assert jnp.allclose(out2, ref2, atol=1e-5, rtol=1e-5), err2

    # bf16 fast path (no f32 upcast, single-pass bf16 MXU), checked at bf16 tolerance.
    xb = x2.astype(jnp.bfloat16)
    outb = jax.block_until_ready(dwt(xb))
    refb = dwt_reference(xb.astype(jnp.float32))
    assert outb.dtype == jnp.bfloat16
    errb = float(jnp.max(jnp.abs(outb.astype(jnp.float32) - refb)))
    assert jnp.allclose(outb.astype(jnp.float32), refb, atol=5e-2, rtol=5e-2), errb

    print("KERNEL_OK")
</pallas_src>

<mosaic_0001>
module attributes {stable_mosaic.version = 11 : i64} {
  func.func @_dwt_kernel(%arg0: i32, %arg1: i32, %arg2: i32, %arg3: memref<16x16xbf16, #tpu.memory_space<vmem>>, %arg4: memref<1x4x8x32xf32, #tpu.memory_space<vmem>>, %arg5: memref<1x4x4x8x8xf32, #tpu.memory_space<vmem>>) attributes {dimension_semantics = [#tpu.dimension_semantics<parallel>, #tpu.dimension_semantics<parallel>, #tpu.dimension_semantics<parallel>], iteration_bounds = array<i64: 2, 1, 1>, scalar_prefetch = 0 : i64, scratch_operands = 0 : i64, tpu.core_type = #tpu.core_type<tc>, window_params = [{pipeline_mode = #tpu.pipeline_mode<synchronous>, transform_indices = @transform_0, window_bounds = array<i64: 16, 16>}, {transform_indices = @transform_1, window_bounds = array<i64: 1, 4, 8, 32>}, {transform_indices = @transform_2, window_bounds = array<i64: 1, 4, 4, 8, 8>}]} {
    %c0 = arith.constant 0 : index
    %c0_0 = arith.constant 0 : index
    %c0_1 = arith.constant 0 : index
    %c0_2 = arith.constant 0 : index
    %0 = vector.load %arg4[%c0, %c0_0, %c0_1, %c0_2] : memref<1x4x8x32xf32, #tpu.memory_space<vmem>>, vector<1x4x8x16xf32>
    %1 = vector.shape_cast %0 : vector<1x4x8x16xf32> to vector<4x8x16xf32>
    %c0_3 = arith.constant 0 : index
    %c0_4 = arith.constant 0 : index
    %c0_5 = arith.constant 0 : index
    %c16 = arith.constant 16 : index
    %2 = vector.load %arg4[%c0_3, %c0_4, %c0_5, %c16] : memref<1x4x8x32xf32, #tpu.memory_space<vmem>>, vector<1x4x8x16xf32>
    %3 = vector.shape_cast %2 : vector<1x4x8x16xf32> to vector<4x8x16xf32>
    %4 = arith.addf %1, %3 : vector<4x8x16xf32>
    %5 = arith.subf %3, %1 : vector<4x8x16xf32>
    %6 = vector.shape_cast %4 : vector<4x8x16xf32> to vector<32x16xf32>
    %7 = vector.shape_cast %5 : vector<4x8x16xf32> to vector<32x16xf32>
    %c0_6 = arith.constant 0 : index
    %c0_7 = arith.constant 0 : index
    %8 = vector.load %arg3[%c0_6, %c0_7] : memref<16x16xbf16, #tpu.memory_space<vmem>>, vector<16x16xbf16>
    %9 = arith.truncf %6 : vector<32x16xf32> to vector<32x16xbf16>
    %10 = arith.extf %9 : vector<32x16xbf16> to vector<32x16xf32>
    %11 = arith.subf %6, %10 : vector<32x16xf32>
    %12 = arith.truncf %11 : vector<32x16xf32> to vector<32x16xbf16>
    %13 = arith.extf %12 : vector<32x16xbf16> to vector<32x16xf32>
    %14 = arith.subf %11, %13 : vector<32x16xf32>
    %15 = arith.truncf %14 : vector<32x16xf32> to vector<32x16xbf16>
    %cst = arith.constant dense<0.000000e+00> : vector<32x16xf32>
    %16 = tpu.matmul %9, %8, %cst {dimension_numbers = #tpu.dot_dimension_numbers<[1], [0], [0], [1], [0, 0, 1, 1], [], []>} : vector<32x16xbf16>, vector<16x16xbf16>, vector<32x16xf32> -> vector<32x16xf32>
    %cst_8 = arith.constant dense<0.000000e+00> : vector<32x16xf32>
    %17 = tpu.matmul %12, %8, %cst_8 {dimension_numbers = #tpu.dot_dimension_numbers<[1], [0], [0], [1], [0, 0, 1, 1], [], []>} : vector<32x16xbf16>, vector<16x16xbf16>, vector<32x16xf32> -> vector<32x16xf32>
    %18 = arith.addf %16, %17 : vector<32x16xf32>
    %cst_9 = arith.constant dense<0.000000e+00> : vector<32x16xf32>
    %19 = tpu.matmul %15, %8, %cst_9 {dimension_numbers = #tpu.dot_dimension_numbers<[1], [0], [0], [1], [0, 0, 1, 1], [], []>} : vector<32x16xbf16>, vector<16x16xbf16>, vector<32x16xf32> -> vector<32x16xf32>
    %20 = arith.addf %18, %19 : vector<32x16xf32>
    %21 = vector.shape_cast %20 : vector<32x16xf32> to vector<4x8x16xf32>
    %22 = arith.truncf %7 : vector<32x16xf32> to vector<32x16xbf16>
    %23 = arith.extf %22 : vector<32x16xbf16> to vector<32x16xf32>
    %24 = arith.subf %7, %23 : vector<32x16xf32>
    %25 = arith.truncf %24 : vector<32x16xf32> to vector<32x16xbf16>
    %26 = arith.extf %25 : vector<32x16xbf16> to vector<32x16xf32>
    %27 = arith.subf %24, %26 : vector<32x16xf32>
    %28 = arith.truncf %27 : vector<32x16xf32> to vector<32x16xbf16>
    %cst_10 = arith.constant dense<0.000000e+00> : vector<32x16xf32>
    %29 = tpu.matmul %22, %8, %cst_10 {dimension_numbers = #tpu.dot_dimension_numbers<[1], [0], [0], [1], [0, 0, 1, 1], [], []>} : vector<32x16xbf16>, vector<16x16xbf16>, vector<32x16xf32> -> vector<32x16xf32>
    %cst_11 = arith.constant dense<0.000000e+00> : vector<32x16xf32>
    %30 = tpu.matmul %25, %8, %cst_11 {dimension_numbers = #tpu.dot_dimension_numbers<[1], [0], [0], [1], [0, 0, 1, 1], [], []>} : vector<32x16xbf16>, vector<16x16xbf16>, vector<32x16xf32> -> vector<32x16xf32>
    %31 = arith.addf %29, %30 : vector<32x16xf32>
    %cst_12 = arith.constant dense<0.000000e+00> : vector<32x16xf32>
    %32 = tpu.matmul %28, %8, %cst_12 {dimension_numbers = #tpu.dot_dimension_numbers<[1], [0], [0], [1], [0, 0, 1, 1], [], []>} : vector<32x16xbf16>, vector<16x16xbf16>, vector<32x16xf32> -> vector<32x16xf32>
    %33 = arith.addf %31, %32 : vector<32x16xf32>
    %34 = vector.shape_cast %33 : vector<32x16xf32> to vector<4x8x16xf32>
    %35 = vector.extract_strided_slice %21 {offsets = [0, 0, 0], sizes = [4, 8, 8], strides = [1, 1, 1]} : vector<4x8x16xf32> to vector<4x8x8xf32>
    %c0_13 = arith.constant 0 : index
    %c0_14 = arith.constant 0 : index
    %c0_15 = arith.constant 0 : index
    %c0_16 = arith.constant 0 : index
    %c0_17 = arith.constant 0 : index
    %36 = vector.load %arg5[%c0_13, %c0_14, %c0_15, %c0_16, %c0_17] : memref<1x4x4x8x8xf32, #tpu.memory_space<vmem>>, vector<1x1x4x8x8xf32>
    %37 = vector.shape_cast %36 : vector<1x1x4x8x8xf32> to vector<4x8x8xf32>
    %38 = vector.shape_cast %35 : vector<4x8x8xf32> to vector<1x1x4x8x8xf32>
    tpu.vector_store %arg5[%c0_13, %c0_14, %c0_15, %c0_16, %c0_17], %38 {strides = array<i32>} : memref<1x4x4x8x8xf32, #tpu.memory_space<vmem>>, vector<1x1x4x8x8xf32>,
    %39 = vector.extract_strided_slice %21 {offsets = [0, 0, 8], sizes = [4, 8, 8], strides = [1, 1, 1]} : vector<4x8x16xf32> to vector<4x8x8xf32>
    %c0_18 = arith.constant 0 : index
    %c1 = arith.constant 1 : index
    %c0_19 = arith.constant 0 : index
    %c0_20 = arith.constant 0 : index
    %c0_21 = arith.constant 0 : index
    %40 = vector.load %arg5[%c0_18, %c1, %c0_19, %c0_20, %c0_21] : memref<1x4x4x8x8xf32, #tpu.memory_space<vmem>>, vector<1x1x4x8x8xf32>
    %41 = vector.shape_cast %40 : vector<1x1x4x8x8xf32> to vector<4x8x8xf32>
    %42 = vector.shape_cast %39 : vector<4x8x8xf32> to vector<1x1x4x8x8xf32>
    tpu.vector_store %arg5[%c0_18, %c1, %c0_19, %c0_20, %c0_21], %42 {strides = array<i32>} : memref<1x4x4x8x8xf32, #tpu.memory_space<vmem>>, vector<1x1x4x8x8xf32>,
    %43 = vector.extract_strided_slice %34 {offsets = [0, 0, 0], sizes = [4, 8, 8], strides = [1, 1, 1]} : vector<4x8x16xf32> to vector<4x8x8xf32>
    %c0_22 = arith.constant 0 : index
    %c2 = arith.constant 2 : index
    %c0_23 = arith.constant 0 : index
    %c0_24 = arith.constant 0 : index
    %c0_25 = arith.constant 0 : index
    %44 = vector.load %arg5[%c0_22, %c2, %c0_23, %c0_24, %c0_25] : memref<1x4x4x8x8xf32, #tpu.memory_space<vmem>>, vector<1x1x4x8x8xf32>
    %45 = vector.shape_cast %44 : vector<1x1x4x8x8xf32> to vector<4x8x8xf32>
    %46 = vector.shape_cast %43 : vector<4x8x8xf32> to vector<1x1x4x8x8xf32>
    tpu.vector_store %arg5[%c0_22, %c2, %c0_23, %c0_24, %c0_25], %46 {strides = array<i32>} : memref<1x4x4x8x8xf32, #tpu.memory_space<vmem>>, vector<1x1x4x8x8xf32>,
    %47 = vector.extract_strided_slice %34 {offsets = [0, 0, 8], sizes = [4, 8, 8], strides = [1, 1, 1]} : vector<4x8x16xf32> to vector<4x8x8xf32>
    %c0_26 = arith.constant 0 : index
    %c3 = arith.constant 3 : index
    %c0_27 = arith.constant 0 : index
    %c0_28 = arith.constant 0 : index
    %c0_29 = arith.constant 0 : index
    %48 = vector.load %arg5[%c0_26, %c3, %c0_27, %c0_28, %c0_29] : memref<1x4x4x8x8xf32, #tpu.memory_space<vmem>>, vector<1x1x4x8x8xf32>
    %49 = vector.shape_cast %48 : vector<1x1x4x8x8xf32> to vector<4x8x8xf32>
    %50 = vector.shape_cast %47 : vector<4x8x8xf32> to vector<1x1x4x8x8xf32>
    tpu.vector_store %arg5[%c0_26, %c3, %c0_27, %c0_28, %c0_29], %50 {strides = array<i32>} : memref<1x4x4x8x8xf32, #tpu.memory_space<vmem>>, vector<1x1x4x8x8xf32>,
    return
  }
  func.func @transform_0(%arg0: i32, %arg1: i32, %arg2: i32) -> (i32, i32) {
    %c0_i32 = arith.constant 0 : i32
    %c0_i32_0 = arith.constant 0 : i32
    %c0_i32_1 = arith.constant 0 : i32
    return %c0_i32, %c0_i32_0 : i32, i32
  }
  func.func @transform_1(%arg0: i32, %arg1: i32, %arg2: i32) -> (i32, i32, i32, i32) {
    %c0_i32 = arith.constant 0 : i32
    %c0_i32_0 = arith.constant 0 : i32
    return %arg0, %arg1, %arg2, %c0_i32 : i32, i32, i32, i32
  }
  func.func @transform_2(%arg0: i32, %arg1: i32, %arg2: i32) -> (i32, i32, i32, i32, i32) {
    %c0_i32 = arith.constant 0 : i32
    %c0_i32_0 = arith.constant 0 : i32
    %c0_i32_1 = arith.constant 0 : i32
    return %arg0, %c0_i32, %arg1, %arg2, %c0_i32_0 : i32, i32, i32, i32, i32
  }
}

</mosaic_0001>

<llo_original>
// kernel: dwt.1
$region0: #{dwt.1}
  #allocation0 [shape = 'u32[]', space=smem, size = 0x4, offset = 0x4, fixed_abs, tag = 'smem constant byte address 0x4 - core index']
  #allocation1 [shape = 'u32[144,128]{1,0:T(1,128)}', space=vmem, size = 0x12000, scoped, tag = 'internal scratch']
  %s0 = inlined_call_operand.vmem [shape: bf16[16,16], index: 0, kind: input, shape index: {}]
  %s1 = inlined_call_operand.vmem [shape: f32[2,4,8,32], index: 1, kind: input, shape index: {}]
  %s2 = inlined_call_operand.vmem [shape: f32[2,4,4,8,8], index: 2, kind: output, shape index: {}]
  %s3 = sld [smem:[#allocation0]]
  $region41: #{dwt.1} parent=0
    _
  %s5 = ssub.s32 1, %s3
  %s6 = scalar_select 0, %s5, %s3
  loop: start=0, step=1, limit=4
  $region2: #{dwt.1} parent=0 // loop_pre_header
    _
  $region3: #{dwt.1} parent=0 // loop_header
    %s8 = sphi 0, %s12
    %p9 = scmp.ge.s32.totalorder %s8, 4
    %s15 = sphi 0, %s34
    %s16 = sphi 0, %s30
    %s17 = sphi 0, %s26
    %s18 = sphi 0, %s15
    %s19 = sphi 0, %s16
    %s20 = sphi 0, %s17
    %s21 = sphi 0, %s18
    %s22 = sphi 0, %s19
    %s23 = sphi 0, %s20
    %s35 = sphi 0, %s35
    %s37 = sphi 0, %s35
    %s38 = sphi 0, %s37
    %s52 = sphi 0, %s38
    %s62 = sphi 0, %s64
    %s65 = sphi 0, %s62
    %s66 = sphi 0, %s65
    %s82 = sphi 0, %s66
    %s92 = sphi 0, %s94
    %s95 = sphi 0, %s92
    %s96 = sphi 0, %s95
    %s112 = sphi 0, %s96
  $region4: #{dwt.1} parent=0 // loop_header_branch
    %11 = sbr.rel (%p9) target = $region8
  $region5: #{dwt.1} parent=0 // loop_body
    %s13 = ssub.s32 %s8, 1
    %s14 = ssub.s32 %s8, 2
    %s24 = sadd.s32 1, %s17
    %p25 = scmp.ge.s32.totalorder %s24, 1
    %s26 = scalar_select %p25, 0, %s24
    %s27 = sadd.s32 1, %s16
    %s28 = scalar_select %p25, %s27, %s16
    %p29 = scmp.ge.s32.totalorder %s28, 1
    %s30 = scalar_select %p29, 0, %s28
    %s31 = sadd.s32 1, %s15
    %s32 = scalar_select %p29, %s31, %s15
    %p33 = scmp.ge.s32.totalorder %s32, 2
    %s34 = scalar_select %p33, 0, %s32
    %s36 = sadd.s32 %s35, 1
    %p39 = scmp.eq.s32.totalorder %s8, 1
    %p40 = scmp.ne.s32.totalorder %s35, %s37
    %p41 = scmp.eq.s32.totalorder %s8, 0
    %p42 = por %p40, %p41
    %p43 = scmp.ne.s32.totalorder %s35, %s37
    %p44 = scmp.eq.s32.totalorder %s13, 1
    %p45 = por %p43, %p44
    %p46 = scmp.ne.s32.totalorder %s37, %s38
    %p47 = scmp.eq.s32.totalorder %s13, 0
    %p48 = por %p46, %p47
    %p49 = scmp.ne.s32.totalorder %s37, %s38
    %p50 = scmp.eq.s32.totalorder %s14, 1
    %p51 = por %p49, %p50
    %p53 = scmp.ne.s32.totalorder %s38, %s52
    %p54 = scmp.eq.s32.totalorder %s14, 0
    %p55 = por %p53, %p54
    %s56 = ssub.s32 %s15, %s34
    %s57 = ssub.s32 %s16, %s30
    %s58 = sor.u32 %s56, %s57
    %s59 = ssub.s32 %s17, %s26
    %s60 = sor.u32 %s58, %s59
    %p61 = scmp.eq.s32.totalorder %s60, 0
    %s63 = sadd.s32 %s62, 1
    %s64 = scalar_select %p61, %s62, %s63
    %p67 = pneg %p61
    %p68 = scmp.eq.s32.totalorder %s8, 1
    %p69 = por %p67, %p68
    %p70 = scmp.ne.s32.totalorder %s62, %s65
    %p71 = scmp.eq.s32.totalorder %s8, 0
    %p72 = por %p70, %p71
    %p73 = scmp.ne.s32.totalorder %s62, %s65
    %p74 = scmp.eq.s32.totalorder %s13, 1
    %p75 = por %p73, %p74
    %p76 = scmp.ne.s32.totalorder %s65, %s66
    %p77 = scmp.eq.s32.totalorder %s13, 0
    %p78 = por %p76, %p77
    %p79 = scmp.ne.s32.totalorder %s65, %s66
    %p80 = scmp.eq.s32.totalorder %s14, 1
    %p81 = por %p79, %p80
    %p83 = scmp.ne.s32.totalorder %s66, %s82
    %p84 = scmp.eq.s32.totalorder %s14, 0
    %p85 = por %p83, %p84
    %s86 = ssub.s32 %s15, %s34
    %s87 = ssub.s32 %s16, %s30
    %s88 = sor.u32 %s86, %s87
    %s89 = ssub.s32 %s17, %s26
    %s90 = sor.u32 %s88, %s89
    %p91 = scmp.eq.s32.totalorder %s90, 0
    %s93 = sadd.s32 %s92, 1
    %s94 = scalar_select %p91, %s92, %s93
    %p97 = pneg %p91
    %p98 = scmp.eq.s32.totalorder %s8, 1
    %p99 = por %p97, %p98
    %p100 = scmp.ne.s32.totalorder %s92, %s95
    %p101 = scmp.eq.s32.totalorder %s8, 0
    %p102 = por %p100, %p101
    %p103 = scmp.ne.s32.totalorder %s92, %s95
    %p104 = scmp.eq.s32.totalorder %s13, 1
    %p105 = por %p103, %p104
    %p106 = scmp.ne.s32.totalorder %s95, %s96
    %p107 = scmp.eq.s32.totalorder %s13, 0
    %p108 = por %p106, %p107
    %p109 = scmp.ne.s32.totalorder %s95, %s96
    %p110 = scmp.eq.s32.totalorder %s14, 1
    %p111 = por %p109, %p110
    %p113 = scmp.ne.s32.totalorder %s96, %s112
    %p114 = scmp.eq.s32.totalorder %s14, 0
    %p115 = por %p113, %p114
    %p116 = scmp.le.s32.totalorder 1, %s8
    %p117 = scmp.lt.s32.totalorder %s8, 3
    %p118 = pnand %p116, %p117
    %p119 = pneg %p118
    // Predicated region
    $region9: #{dwt.1} parent=5 // pred_check
      _
    $region10: #{dwt.1} parent=5 // pred_check_branch
      %121 = sbr.rel (%p118) target = $region12
    $region11: #{dwt.1} parent=5 // pred_region
      %s122 = ssub.s32 %s8, 1
      // Predicated region
      $region13: #{dwt.1} parent=11 // pred_check
        %p123 = pneg %p48
      $region14: #{dwt.1} parent=11 // pred_check_branch
        %125 = sbr.rel (%p123) target = $region16
      $region15: #{dwt.1} parent=11 // pred_region
        _
      $region16: #{dwt.1} parent=11 // pred_fallthru
        _
    $region12: #{dwt.1} parent=5 // pred_fallthru
      _
    %p126 = scmp.lt.s32.totalorder %s8, 2
    // Predicated region
    $region17: #{dwt.1} parent=5 // pred_check
      %p127 = pneg %p126
    $region18: #{dwt.1} parent=5 // pred_check_branch
      %129 = sbr.rel (%p127) target = $region20
    $region19: #{dwt.1} parent=5 // pred_region
      // Predicated region
      $region21: #{dwt.1} parent=19 // pred_check
        %p130 = pneg %p72
      $region22: #{dwt.1} parent=19 // pred_check_branch
        %132 = sbr.rel (%p130) target = $region24
      $region23: #{dwt.1} parent=19 // pred_region
        %s133 = smul.u32 4, %s16
        %p134 = scmp.lt.s32.totalorder %s15, 1
        %s135 = scalar_select %p134, %s15, 1
        %p136 = scmp.lt.s32.totalorder %s133, 3
        %s137 = scalar_select %p136, %s133, 3
        %p138 = scmp.lt.s32.totalorder %s17, 0
        %s139 = scalar_select %p138, %s17, 0
        %s140 = sadd.s32 %s139, %s137
        %s141 = smul.addr %s135, 4
        %s142 = sadd.s32 %s140, %s141
        %s143 = smul.addr %s142, 8
        %s144 = scalar_lea.vmem %s1, %s143
        %s145 = smul.u32 4, %s16
      $region24: #{dwt.1} parent=19 // pred_fallthru
        _
    $region20: #{dwt.1} parent=5 // pred_fallthru
      _
    %p146 = scmp.le.s32.totalorder 1, %s8
    %p147 = scmp.lt.s32.totalorder %s8, 3
    %p148 = pnand %p146, %p147
    %p149 = pneg %p148
    // Predicated region
    $region25: #{dwt.1} parent=5 // pred_check
      _
    $region26: #{dwt.1} parent=5 // pred_check_branch
      %151 = sbr.rel (%p148) target = $region28
    $region27: #{dwt.1} parent=5 // pred_region
      %s152 = ssub.s32 %s8, 1
      %p153 = pneg %p48
      %p154 = pneg %p45
      %s155 = smul.u32 4, %s19
      %p156 = scmp.lt.s32.totalorder %s18, 1
      %s157 = scalar_select %p156, %s18, 1
      %p158 = scmp.lt.s32.totalorder %s155, 3
      %s159 = scalar_select %p158, %s155, 3
      %p160 = scmp.lt.s32.totalorder %s20, 0
      %s161 = scalar_select %p160, %s20, 0
      %s162 = sadd.s32 %s161, %s159
      %s163 = smul.addr %s157, 4
      %s164 = sadd.s32 %s162, %s163
      %s165 = smul.addr %s164, 8
      %s166 = scalar_lea.vmem %s1, %s165
      %p167 = pneg %p78
      %p168 = pneg %p75
      %p169 = pneg %p108
      %p170 = pneg %p105
      %s171 = smul.u32 4, %s19
      %p172 = scmp.lt.s32.totalorder %s18, 1
      %s173 = scalar_select %p172, %s18, 1
      %p174 = scmp.lt.s32.totalorder %s171, 3
      %s175 = scalar_select %p174, %s171, 3
      %p176 = scmp.lt.s32.totalorder %s20, 0
      %s177 = scalar_select %p176, %s20, 0
      %s178 = sadd.s32 %s177, %s175
      %s179 = smul.addr %s173, 16
      %s180 = sadd.s32 %s178, %s179
      %s181 = smul.addr %s180, 8
      %s182 = scalar_lea.vmem %s2, %s181
      %s183 = smul.u32 4, %s19
      %p184 = scmp.lt.s32.totalorder %s18, 1
      %s185 = scalar_select %p184, %s18, 1
      %p186 = scmp.lt.s32.totalorder %s183, 3
      %s187 = scalar_select %p186, %s183, 3
      %p188 = scmp.lt.s32.totalorder %s20, 0
      %s189 = scalar_select %p188, %s20, 0
      %s190 = sadd.s32 %s189, %s187
      %s191 = smul.addr %s185, 4
      %s192 = sadd.s32 %s190, %s191
      %s193 = smul.addr %s192, 8
      %s194 = scalar_lea.vmem %s1, %s193
      %s195 = smul.u32 4, %s19
      %s196 = smul.u32 4, %s19
      %p197 = scmp.lt.s32.totalorder %s18, 1
      %s198 = scalar_select %p197, %s18, 1
      %p199 = scmp.lt.s32.totalorder %s196, 3
      %s200 = scalar_select %p199, %s196, 3
      %p201 = scmp.lt.s32.totalorder %s20, 0
      %s202 = scalar_select %p201, %s20, 0
      %s203 = sadd.s32 %s202, %s200
      %s204 = smul.addr %s198, 16
      %s205 = sadd.s32 %s203, %s204
      %s206 = smul.addr %s205, 8
      %s207 = scalar_lea.vmem %s2, %s206
      %s208 = smul.u32 4, %s19
      %v210 = vld [vmem:[%s194] sm:$0xff]
      %v211 = vld [vmem:[%s194 + $0x8] sm:$0xff]
      %v212 = vld [vmem:[%s194 + $0x10] sm:$0xff]
      %v213 = vld [vmem:[%s194 + $0x18] sm:$0xff]
      %218 = vrot.lane.b32.xlu0 %v210, 112
      %v219 = vpop.permute.xlu0 %218
      %220 = vrot.lane.b32.xlu0 %v211, 112
      %v221 = vpop.permute.xlu0 %220
      %222 = vrot.lane.b32.xlu0 %v212, 112
      %v223 = vpop.permute.xlu0 %222
      %224 = vrot.lane.b32.xlu0 %v213, 112
      %v225 = vpop.permute.xlu0 %224
      %v230 = vadd.f32 %v210, %v219
      %v231 = vadd.f32 %v211, %v221
      %v232 = vadd.f32 %v212, %v223
      %v233 = vadd.f32 %v213, %v225
      %234 = vrot.lane.b32.xlu0 %v210, 16
      %v235 = vpop.permute.xlu0 %234
      %236 = vrot.lane.b32.xlu0 %v211, 16
      %v237 = vpop.permute.xlu0 %236
      %238 = vrot.lane.b32.xlu0 %v212, 16
      %v239 = vpop.permute.xlu0 %238
      %240 = vrot.lane.b32.xlu0 %v213, 16
      %v241 = vpop.permute.xlu0 %240
      %v246 = vsub.f32 %v210, %v235
      %v247 = vsub.f32 %v211, %v237
      %v248 = vsub.f32 %v212, %v239
      %v249 = vsub.f32 %v213, %v241
      %v250 = vld [vmem:[%s0] sm:$0xf]
      %v251 = vld [vmem:[%s0 + $0x4] sm:$0xf]
      %v252 = vpack.c.bf16 %v231, %v230
      %v253 = vpack.c.bf16 %v233, %v232
      %v254 = vunpack.c.l.bf16 %v252
      %v255 = vunpack.c.h.bf16 %v252
      %v256 = vunpack.c.l.bf16 %v253
      %v257 = vunpack.c.h.bf16 %v253
      %v258 = vsub.f32 %v230, %v254
      %v259 = vsub.f32 %v231, %v255
      %v260 = vsub.f32 %v232, %v256
      %v261 = vsub.f32 %v233, %v257
      %v262 = vpack.c.bf16 %v259, %v258
      %v263 = vpack.c.bf16 %v261, %v260
      %v264 = vunpack.c.l.bf16 %v262
      %v265 = vunpack.c.h.bf16 %v262
      %v266 = vunpack.c.l.bf16 %v263
      %v267 = vunpack.c.h.bf16 %v263
      %v268 = vsub.f32 %v258, %v264
      %v269 = vsub.f32 %v259, %v265
      %v270 = vsub.f32 %v260, %v266
      %v271 = vsub.f32 %v261, %v267
      %v272 = vpack.c.bf16 %v269, %v268
      %v273 = vpack.c.bf16 %v271, %v270
      %v276 = vunpack.c.l.b16 %v250
      %v277 = vunpack.c.l.b16 %v251
      %v278 = vpack.c.b16 %v277, %v276
      %vm280 = vcmask 130048
      %v282 = vsel %vm280, %v262, 0
      %v285 = vsel %vm280, %v263, 0
      %287 = vmatprep.subr.bf16.mxu0 0
      %288 = vmatpush1.bf16.msra.mxu0 %v278
      %289 = vmatprep.subr.bf16.mxu0 0
      %290 = vmatpush1.bf16.msra.mxu0 0
      %291 = vmatprep.subr.bf16.mxu0 0
      %292 = vmatpush1.bf16.msra.mxu0 0
      %293 = vmatprep.subr.bf16.mxu0 0
      %294 = vmatpush1.bf16.msra.mxu0 0
      %295 = vmatprep.subr.bf16.mxu0 0
      %296 = vmatpush1.bf16.msra.mxu0 0
      %297 = vmatprep.subr.bf16.mxu0 0
      %298 = vmatpush1.bf16.msra.mxu0 0
      %299 = vmatprep.subr.bf16.mxu0 0
      %300 = vmatpush1.bf16.msra.mxu0 0
      %301 = vmatprep.subr.bf16.mxu0 0
      %302 = vmatpush1.bf16.msra.mxu0 0
      %303 = vmatprep.subr.bf16.mxu0 0
      %304 = vmatpush1.bf16.msra.mxu0 0
      %305 = vmatprep.subr.bf16.mxu0 0
      %306 = vmatpush1.bf16.msra.mxu0 0
      %307 = vmatprep.subr.bf16.mxu0 0
      %308 = vmatpush1.bf16.msra.mxu0 0
      %309 = vmatprep.subr.bf16.mxu0 0
      %310 = vmatpush1.bf16.msra.mxu0 0
      %311 = vmatprep.subr.bf16.mxu0 0
      %312 = vmatpush1.bf16.msra.mxu0 0
      %313 = vmatprep.subr.bf16.mxu0 0
      %314 = vmatpush1.bf16.msra.mxu0 0
      %315 = vmatprep.subr.bf16.mxu0 0
      %316 = vmatpush1.bf16.msra.mxu0 0
      %317 = vmatprep.subr.bf16.mxu0 0
      %318 = vmatpush1.bf16.msra.mxu0 0
      %319 = vmatprep.mubr.bf16.mxu0 0
      %320 = vmatmul.mubr.bf16.gmra.mrb[0].mxu0 %v282
      %v321 = vpop.f32.mrb[0].mxu0
      %v322 = vadd.f32 0.0, %v321
      %v323 = vpop.f32.mrb[0].mxu0
      %v324 = vpop.f32.mrb[0].mxu0
      %v325 = vadd.f32 0.0, %v324
      %v326 = vpop.f32.mrb[0].mxu0
      %327 = vmatprep.mubr.bf16.mxu0 0
      %328 = vmatmul.mubr.bf16.gmra.mrb[0].mxu0 %v285
      %v329 = vpop.f32.mrb[0].mxu0
      %v330 = vadd.f32 0.0, %v329
      %v331 = vpop.f32.mrb[0].mxu0
      %v332 = vpop.f32.mrb[0].mxu0
      %v333 = vadd.f32 0.0, %v332
      %v334 = vpop.f32.mrb[0].mxu0
      %335 = vdwg.mxu0
      %v337 = vsel %vm280, %v252, 0
      %v340 = vsel %vm280, %v253, 0
      %342 = vmatprep.subr.bf16.mxu0 0
      %343 = vmatpush1.bf16.msra.mxu0 %v278
      %344 = vmatprep.subr.bf16.mxu0 0
      %345 = vmatpush1.bf16.msra.mxu0 0
      %346 = vmatprep.subr.bf16.mxu0 0
      %347 = vmatpush1.bf16.msra.mxu0 0
      %348 = vmatprep.subr.bf16.mxu0 0
      %349 = vmatpush1.bf16.msra.mxu0 0
      %350 = vmatprep.subr.bf16.mxu0 0
      %351 = vmatpush1.bf16.msra.mxu0 0
      %352 = vmatprep.subr.bf16.mxu0 0
      %353 = vmatpush1.bf16.msra.mxu0 0
      %354 = vmatprep.subr.bf16.mxu0 0
      %355 = vmatpush1.bf16.msra.mxu0 0
      %356 = vmatprep.subr.bf16.mxu0 0
      %357 = vmatpush1.bf16.msra.mxu0 0
      %358 = vmatprep.subr.bf16.mxu0 0
      %359 = vmatpush1.bf16.msra.mxu0 0
      %360 = vmatprep.subr.bf16.mxu0 0
      %361 = vmatpush1.bf16.msra.mxu0 0
      %362 = vmatprep.subr.bf16.mxu0 0
      %363 = vmatpush1.bf16.msra.mxu0 0
      %364 = vmatprep.subr.bf16.mxu0 0
      %365 = vmatpush1.bf16.msra.mxu0 0
      %366 = vmatprep.subr.bf16.mxu0 0
      %367 = vmatpush1.bf16.msra.mxu0 0
      %368 = vmatprep.subr.bf16.mxu0 0
      %369 = vmatpush1.bf16.msra.mxu0 0
      %370 = vmatprep.subr.bf16.mxu0 0
      %371 = vmatpush1.bf16.msra.mxu0 0
      %372 = vmatprep.subr.bf16.mxu0 0
      %373 = vmatpush1.bf16.msra.mxu0 0
      %374 = vmatprep.mubr.bf16.mxu0 0
      %375 = vmatmul.mubr.bf16.gmra.mrb[0].mxu0 %v337
      %v376 = vpop.f32.mrb[0].mxu0
      %v377 = vadd.f32 %v322, %v376
      %v378 = vpop.f32.mrb[0].mxu0
      %v379 = vpop.f32.mrb[0].mxu0
      %v380 = vadd.f32 %v325, %v379
      %v381 = vpop.f32.mrb[0].mxu0
      %382 = vmatprep.mubr.bf16.mxu0 0
      %383 = vmatmul.mubr.bf16.gmra.mrb[0].mxu0 %v340
      %v384 = vpop.f32.mrb[0].mxu0
      %v385 = vadd.f32 %v330, %v384
      %v386 = vpop.f32.mrb[0].mxu0
      %v387 = vpop.f32.mrb[0].mxu0
      %v388 = vadd.f32 %v333, %v387
      %v389 = vpop.f32.mrb[0].mxu0
      %390 = vdwg.mxu0
      %v392 = vsel %vm280, %v272, 0
      %v395 = vsel %vm280, %v273, 0
      %397 = vmatprep.subr.bf16.mxu0 0
      %398 = vmatpush1.bf16.msra.mxu0 %v278
      %399 = vmatprep.subr.bf16.mxu0 0
      %400 = vmatpush1.bf16.msra.mxu0 0
      %401 = vmatprep.subr.bf16.mxu0 0
      %402 = vmatpush1.bf16.msra.mxu0 0
      %403 = vmatprep.subr.bf16.mxu0 0
      %404 = vmatpush1.bf16.msra.mxu0 0
      %405 = vmatprep.subr.bf16.mxu0 0
      %406 = vmatpush1.bf16.msra.mxu0 0
      %407 = vmatprep.subr.bf16.mxu0 0
      %408 = vmatpush1.bf16.msra.mxu0 0
      %409 = vmatprep.subr.bf16.mxu0 0
      %410 = vmatpush1.bf16.msra.mxu0 0
      %411 = vmatprep.subr.bf16.mxu0 0
      %412 = vmatpush1.bf16.msra.mxu0 0
      %413 = vmatprep.subr.bf16.mxu0 0
      %414 = vmatpush1.bf16.msra.mxu0 0
      %415 = vmatprep.subr.bf16.mxu0 0
      %416 = vmatpush1.bf16.msra.mxu0 0
      %417 = vmatprep.subr.bf16.mxu0 0
      %418 = vmatpush1.bf16.msra.mxu0 0
      %419 = vmatprep.subr.bf16.mxu0 0
      %420 = vmatpush1.bf16.msra.mxu0 0
      %421 = vmatprep.subr.bf16.mxu0 0
      %422 = vmatpush1.bf16.msra.mxu0 0
      %423 = vmatprep.subr.bf16.mxu0 0
      %424 = vmatpush1.bf16.msra.mxu0 0
      %425 = vmatprep.subr.bf16.mxu0 0
      %426 = vmatpush1.bf16.msra.mxu0 0
      %427 = vmatprep.subr.bf16.mxu0 0
      %428 = vmatpush1.bf16.msra.mxu0 0
      %429 = vmatprep.mubr.bf16.mxu0 0
      %430 = vmatmul.mubr.bf16.gmra.mrb[0].mxu0 %v392
      %v431 = vpop.f32.mrb[0].mxu0
      %v432 = vadd.f32 0.0, %v431
      %v433 = vpop.f32.mrb[0].mxu0
      %v434 = vpop.f32.mrb[0].mxu0
      %v435 = vadd.f32 0.0, %v434
      %v436 = vpop.f32.mrb[0].mxu0
      %437 = vmatprep.mubr.bf16.mxu0 0
      %438 = vmatmul.mubr.bf16.gmra.mrb[0].mxu0 %v395
      %v439 = vpop.f32.mrb[0].mxu0
      %v440 = vadd.f32 0.0, %v439
      %v441 = vpop.f32.mrb[0].mxu0
      %v442 = vpop.f32.mrb[0].mxu0
      %v443 = vadd.f32 0.0, %v442
      %v444 = vpop.f32.mrb[0].mxu0
      %445 = vdwg.mxu0
      %v446 = vadd.f32 %v377, %v432
      %v447 = vadd.f32 %v380, %v435
      %v448 = vadd.f32 %v385, %v440
      %v449 = vadd.f32 %v388, %v443
      %v450 = vpack.c.bf16 %v247, %v246
      %v451 = vpack.c.bf16 %v249, %v248
      %v452 = vunpack.c.l.bf16 %v450
      %v453 = vunpack.c.h.bf16 %v450
      %v454 = vunpack.c.l.bf16 %v451
      %v455 = vunpack.c.h.bf16 %v451
      %v456 = vsub.f32 %v246, %v452
      %v457 = vsub.f32 %v247, %v453
      %v458 = vsub.f32 %v248, %v454
      %v459 = vsub.f32 %v249, %v455
      %v460 = vpack.c.bf16 %v457, %v456
      %v461 = vpack.c.bf16 %v459, %v458
      %v462 = vunpack.c.l.bf16 %v460
      %v463 = vunpack.c.h.bf16 %v460
      %v464 = vunpack.c.l.bf16 %v461
      %v465 = vunpack.c.h.bf16 %v461
      %v466 = vsub.f32 %v456, %v462
      %v467 = vsub.f32 %v457, %v463
      %v468 = vsub.f32 %v458, %v464
      %v469 = vsub.f32 %v459, %v465
      %v470 = vpack.c.bf16 %v467, %v466
      %v471 = vpack.c.bf16 %v469, %v468
      %474 = vrot.lane.b32.xlu0 %v460, 112
      %v475 = vpop.permute.xlu0 %474
      %476 = vrot.lane.b32.xlu0 %v461, 112
      %v477 = vpop.permute.xlu0 %476
      %v479 = vsel %vm280, %v475, 0
      %v482 = vsel %vm280, %v477, 0
      %484 = vmatprep.subr.bf16.mxu0 0
      %485 = vmatpush1.bf16.msra.mxu0 %v278
      %486 = vmatprep.subr.bf16.mxu0 0
      %487 = vmatpush1.bf16.msra.mxu0 0
      %488 = vmatprep.subr.bf16.mxu0 0
      %489 = vmatpush1.bf16.msra.mxu0 0
      %490 = vmatprep.subr.bf16.mxu0 0
      %491 = vmatpush1.bf16.msra.mxu0 0
      %492 = vmatprep.subr.bf16.mxu0 0
      %493 = vmatpush1.bf16.msra.mxu0 0
      %494 = vmatprep.subr.bf16.mxu0 0
      %495 = vmatpush1.bf16.msra.mxu0 0
      %496 = vmatprep.subr.bf16.mxu0 0
      %497 = vmatpush1.bf16.msra.mxu0 0
      %498 = vmatprep.subr.bf16.mxu0 0
      %499 = vmatpush1.bf16.msra.mxu0 0
      %500 = vmatprep.subr.bf16.mxu0 0
      %501 = vmatpush1.bf16.msra.mxu0 0
      %502 = vmatprep.subr.bf16.mxu0 0
      %503 = vmatpush1.bf16.msra.mxu0 0
      %504 = vmatprep.subr.bf16.mxu0 0
      %505 = vmatpush1.bf16.msra.mxu0 0
      %506 = vmatprep.subr.bf16.mxu0 0
      %507 = vmatpush1.bf16.msra.mxu0 0
      %508 = vmatprep.subr.bf16.mxu0 0
      %509 = vmatpush1.bf16.msra.mxu0 0
      %510 = vmatprep.subr.bf16.mxu0 0
      %511 = vmatpush1.bf16.msra.mxu0 0
      %512 = vmatprep.subr.bf16.mxu0 0
      %513 = vmatpush1.bf16.msra.mxu0 0
      %514 = vmatprep.subr.bf16.mxu0 0
      %515 = vmatpush1.bf16.msra.mxu0 0
      %516 = vmatprep.mubr.bf16.mxu0 0
      %517 = vmatmul.mubr.bf16.gmra.mrb[0].mxu0 %v479
      %v518 = vpop.f32.mrb[0].mxu0
      %v519 = vadd.f32 0.0, %v518
      %v520 = vpop.f32.mrb[0].mxu0
      %v521 = vpop.f32.mrb[0].mxu0
      %v522 = vadd.f32 0.0, %v521
      %v523 = vpop.f32.mrb[0].mxu0
      %524 = vmatprep.mubr.bf16.mxu0 0
      %525 = vmatmul.mubr.bf16.gmra.mrb[0].mxu0 %v482
      %v526 = vpop.f32.mrb[0].mxu0
      %v527 = vadd.f32 0.0, %v526
      %v528 = vpop.f32.mrb[0].mxu0
      %v529 = vpop.f32.mrb[0].mxu0
      %v530 = vadd.f32 0.0, %v529
      %v531 = vpop.f32.mrb[0].mxu0
      %532 = vdwg.mxu0
      %535 = vrot.lane.b32.xlu0 %v450, 112
      %v536 = vpop.permute.xlu0 %535
      %537 = vrot.lane.b32.xlu0 %v451, 112
      %v538 = vpop.permute.xlu0 %537
      %v540 = vsel %vm280, %v536, 0
      %v543 = vsel %vm280, %v538, 0
      %545 = vmatprep.subr.bf16.mxu0 0
      %546 = vmatpush1.bf16.msra.mxu0 %v278
      %547 = vmatprep.subr.bf16.mxu0 0
      %548 = vmatpush1.bf16.msra.mxu0 0
      %549 = vmatprep.subr.bf16.mxu0 0
      %550 = vmatpush1.bf16.msra.mxu0 0
      %551 = vmatprep.subr.bf16.mxu0 0
      %552 = vmatpush1.bf16.msra.mxu0 0
      %553 = vmatprep.subr.bf16.mxu0 0
      %554 = vmatpush1.bf16.msra.mxu0 0
      %555 = vmatprep.subr.bf16.mxu0 0
      %556 = vmatpush1.bf16.msra.mxu0 0
      %557 = vmatprep.subr.bf16.mxu0 0
      %558 = vmatpush1.bf16.msra.mxu0 0
      %559 = vmatprep.subr.bf16.mxu0 0
      %560 = vmatpush1.bf16.msra.mxu0 0
      %561 = vmatprep.subr.bf16.mxu0 0
      %562 = vmatpush1.bf16.msra.mxu0 0
      %563 = vmatprep.subr.bf16.mxu0 0
      %564 = vmatpush1.bf16.msra.mxu0 0
      %565 = vmatprep.subr.bf16.mxu0 0
      %566 = vmatpush1.bf16.msra.mxu0 0
      %567 = vmatprep.subr.bf16.mxu0 0
      %568 = vmatpush1.bf16.msra.mxu0 0
      %569 = vmatprep.subr.bf16.mxu0 0
      %570 = vmatpush1.bf16.msra.mxu0 0
      %571 = vmatprep.subr.bf16.mxu0 0
      %572 = vmatpush1.bf16.msra.mxu0 0
      %573 = vmatprep.subr.bf16.mxu0 0
      %574 = vmatpush1.bf16.msra.mxu0 0
      %575 = vmatprep.subr.bf16.mxu0 0
      %576 = vmatpush1.bf16.msra.mxu0 0
      %577 = vmatprep.mubr.bf16.mxu0 0
      %578 = vmatmul.mubr.bf16.gmra.mrb[0].mxu0 %v540
      %v579 = vpop.f32.mrb[0].mxu0
      %v580 = vadd.f32 %v519, %v579
      %v581 = vpop.f32.mrb[0].mxu0
      %v582 = vpop.f32.mrb[0].mxu0
      %v583 = vadd.f32 %v522, %v582
      %v584 = vpop.f32.mrb[0].mxu0
      %585 = vmatprep.mubr.bf16.mxu0 0
      %586 = vmatmul.mubr.bf16.gmra.mrb[0].mxu0 %v543
      %v587 = vpop.f32.mrb[0].mxu0
      %v588 = vadd.f32 %v527, %v587
      %v589 = vpop.f32.mrb[0].mxu0
      %v590 = vpop.f32.mrb[0].mxu0
      %v591 = vadd.f32 %v530, %v590
      %v592 = vpop.f32.mrb[0].mxu0
      %593 = vdwg.mxu0
      %596 = vrot.lane.b32.xlu0 %v470, 112
      %v597 = vpop.permute.xlu0 %596
      %598 = vrot.lane.b32.xlu0 %v471, 112
      %v599 = vpop.permute.xlu0 %598
      %v601 = vsel %vm280, %v597, 0
      %v604 = vsel %vm280, %v599, 0
      %606 = vmatprep.subr.bf16.mxu0 0
      %607 = vmatpush1.bf16.msra.mxu0 %v278
      %608 = vmatprep.subr.bf16.mxu0 0
      %609 = vmatpush1.bf16.msra.mxu0 0
      %610 = vmatprep.subr.bf16.mxu0 0
      %611 = vmatpush1.bf16.msra.mxu0 0
      %612 = vmatprep.subr.bf16.mxu0 0
      %613 = vmatpush1.bf16.msra.mxu0 0
      %614 = vmatprep.subr.bf16.mxu0 0
      %615 = vmatpush1.bf16.msra.mxu0 0
      %616 = vmatprep.subr.bf16.mxu0 0
      %617 = vmatpush1.bf16.msra.mxu0 0
      %618 = vmatprep.subr.bf16.mxu0 0
      %619 = vmatpush1.bf16.msra.mxu0 0
      %620 = vmatprep.subr.bf16.mxu0 0
      %621 = vmatpush1.bf16.msra.mxu0 0
      %622 = vmatprep.subr.bf16.mxu0 0
      %623 = vmatpush1.bf16.msra.mxu0 0
      %624 = vmatprep.subr.bf16.mxu0 0
      %625 = vmatpush1.bf16.msra.mxu0 0
      %626 = vmatprep.subr.bf16.mxu0 0
      %627 = vmatpush1.bf16.msra.mxu0 0
      %628 = vmatprep.subr.bf16.mxu0 0
      %629 = vmatpush1.bf16.msra.mxu0 0
      %630 = vmatprep.subr.bf16.mxu0 0
      %631 = vmatpush1.bf16.msra.mxu0 0
      %632 = vmatprep.subr.bf16.mxu0 0
      %633 = vmatpush1.bf16.msra.mxu0 0
      %634 = vmatprep.subr.bf16.mxu0 0
      %635 = vmatpush1.bf16.msra.mxu0 0
      %636 = vmatprep.subr.bf16.mxu0 0
      %637 = vmatpush1.bf16.msra.mxu0 0
      %638 = vmatprep.mubr.bf16.mxu0 0
      %639 = vmatmul.mubr.bf16.gmra.mrb[0].mxu0 %v601
      %v640 = vpop.f32.mrb[0].mxu0
      %v641 = vadd.f32 0.0, %v640
      %v642 = vpop.f32.mrb[0].mxu0
      %v643 = vpop.f32.mrb[0].mxu0
      %v644 = vadd.f32 0.0, %v643
      %v645 = vpop.f32.mrb[0].mxu0
      %646 = vmatprep.mubr.bf16.mxu0 0
      %647 = vmatmul.mubr.bf16.gmra.mrb[0].mxu0 %v604
      %v648 = vpop.f32.mrb[0].mxu0
      %v649 = vadd.f32 0.0, %v648
      %v650 = vpop.f32.mrb[0].mxu0
      %v651 = vpop.f32.mrb[0].mxu0
      %v652 = vadd.f32 0.0, %v651
      %v653 = vpop.f32.mrb[0].mxu0
      %654 = vdwg.mxu0
      %v655 = vadd.f32 %v580, %v641
      %v656 = vadd.f32 %v583, %v644
      %v657 = vadd.f32 %v588, %v649
      %v658 = vadd.f32 %v591, %v652
      %vm659 = vcmask 64512
      %660 = vst.msk [vmem:[%s207] sm:$0xff] %vm659, %v446
      %661 = vst.msk [vmem:[%s207 + $0x8] sm:$0xff] %vm659, %v447
      %662 = vst.msk [vmem:[%s207 + $0x10] sm:$0xff] %vm659, %v448
      %663 = vst.msk [vmem:[%s207 + $0x18] sm:$0xff] %vm659, %v449
      %668 = vrot.lane.b32.xlu0 %v446, 120
      %v669 = vpop.permute.xlu0 %668
      %670 = vrot.lane.b32.xlu0 %v447, 120
      %v671 = vpop.permute.xlu0 %670
      %672 = vrot.lane.b32.xlu0 %v448, 120
      %v673 = vpop.permute.xlu0 %672
      %674 = vrot.lane.b32.xlu0 %v449, 120
      %v675 = vpop.permute.xlu0 %674
      %s680 = scalar_lea.vmem %s207, 32
      %681 = vst.msk [vmem:[%s680] sm:$0xff] %vm659, %v669
      %682 = vst.msk [vmem:[%s680 + $0x8] sm:$0xff] %vm659, %v671
      %683 = vst.msk [vmem:[%s680 + $0x10] sm:$0xff] %vm659, %v673
      %684 = vst.msk [vmem:[%s680 + $0x18] sm:$0xff] %vm659, %v675
      %s685 = scalar_lea.vmem %s207, 64
      %686 = vst.msk [vmem:[%s685] sm:$0xff] %vm659, %v655
      %687 = vst.msk [vmem:[%s685 + $0x8] sm:$0xff] %vm659, %v656
      %688 = vst.msk [vmem:[%s685 + $0x10] sm:$0xff] %vm659, %v657
      %689 = vst.msk [vmem:[%s685 + $0x18] sm:$0xff] %vm659, %v658
      %694 = vrot.lane.b32.xlu0 %v655, 120
      %v695 = vpop.permute.xlu0 %694
      %696 = vrot.lane.b32.xlu0 %v656, 120
      %v697 = vpop.permute.xlu0 %696
      %698 = vrot.lane.b32.xlu0 %v657, 120
      %v699 = vpop.permute.xlu0 %698
      %700 = vrot.lane.b32.xlu0 %v658, 120
      %v701 = vpop.permute.xlu0 %700
      %s706 = scalar_lea.vmem %s207, 96
      %707 = vst.msk [vmem:[%s706] sm:$0xff] %vm659, %v695
      %708 = vst.msk [vmem:[%s706 + $0x8] sm:$0xff] %vm659, %v697
      %709 = vst.msk [vmem:[%s706 + $0x10] sm:$0xff] %vm659, %v699
      %710 = vst.msk [vmem:[%s706 + $0x18] sm:$0xff] %vm659, %v701
      %s711 = smul.u32 4, %s19
      %p712 = scmp.lt.s32.totalorder %s18, 1
      %s713 = scalar_select %p712, %s18, 1
      %p714 = scmp.lt.s32.totalorder %s711, 3
      %s715 = scalar_select %p714, %s711, 3
      %p716 = scmp.lt.s32.totalorder %s20, 0
      %s717 = scalar_select %p716, %s20, 0
      %s718 = sadd.s32 %s717, %s715
      %s719 = smul.addr %s713, 16
      %s720 = sadd.s32 %s718, %s719
      %s721 = smul.addr %s720, 8
      %s722 = scalar_lea.vmem %s2, %s721
      // Predicated region
      $region29: #{dwt.1} parent=27 // pred_check
        %p723 = pneg %p105
      $region30: #{dwt.1} parent=27 // pred_check_branch
        %725 = sbr.rel (%p723) target = $region32
      $region31: #{dwt.1} parent=27 // pred_region
        %s726 = smul.u32 4, %s19
      $region32: #{dwt.1} parent=27 // pred_fallthru
        _
    $region28: #{dwt.1} parent=5 // pred_fallthru
      _
    %p727 = scmp.le.s32.totalorder 2, %s8
    // Predicated region
    $region33: #{dwt.1} parent=5 // pred_check
      %p728 = pneg %p727
    $region34: #{dwt.1} parent=5 // pred_check_branch
      %730 = sbr.rel (%p728) target = $region36
    $region35: #{dwt.1} parent=5 // pred_region
      %s731 = ssub.s32 %s8, 2
      // Predicated region
      $region37: #{dwt.1} parent=35 // pred_check
        %p732 = pneg %p111
      $region38: #{dwt.1} parent=35 // pred_check_branch
        %734 = sbr.rel (%p732) target = $region40
      $region39: #{dwt.1} parent=35 // pred_region
        %s735 = smul.u32 4, %s22
        %p736 = scmp.lt.s32.totalorder %s21, 1
        %s737 = scalar_select %p736, %s21, 1
        %p738 = scmp.lt.s32.totalorder %s735, 3
        %s739 = scalar_select %p738, %s735, 3
        %p740 = scmp.lt.s32.totalorder %s23, 0
        %s741 = scalar_select %p740, %s23, 0
        %s742 = sadd.s32 %s741, %s739
        %s743 = smul.addr %s737, 16
        %s744 = sadd.s32 %s742, %s743
        %s745 = smul.addr %s744, 8
        %s746 = scalar_lea.vmem %s2, %s745
      $region40: #{dwt.1} parent=35 // pred_fallthru
        _
    $region36: #{dwt.1} parent=5 // pred_fallthru
      _
  $region6: #{dwt.1} parent=0 // loop_footer
    %s12 = sadd.s32 1, %s8
  $region7: #{dwt.1} parent=0 // loop_footer_branch
    %7 = sbr.rel target = $region3
  $region8: #{dwt.1} parent=0 // loop_exit
    _

</llo_original>
